<compile_context>
chip_gen: v5e
topology: v5e:2x2
jax: 0.10.0
libtpu: 0.0.40
codegen_flags: <defaults>
</compile_context>

<pallas_src>
import functools

import jax
import jax.numpy as jnp
from jax import lax
from jax.experimental import pallas as pl
from jax.experimental.pallas import tpu as pltpu

# Older jax versions name this TPUCompilerParams; keep a tiny fallback.
_CompilerParams = getattr(pltpu, "CompilerParams", None)
if _CompilerParams is None:  # pragma: no cover
    _CompilerParams = getattr(pltpu, "TPUCompilerParams")


def _attn_kernel(*refs, inv_scale, dropout_p, keep_threshold):
    """Per-batch attention.  Refs are (S, D) tiles (batch squeezed by BlockSpec).

    With dropout enabled the first ref is a (S, S) uint32 random-bits tile.
    """
    use_dropout = 0.0 < dropout_p < 1.0
    if use_dropout:
        bits_ref, q_ref, k_ref, v_ref, o_ref = refs
    else:
        q_ref, k_ref, v_ref, o_ref = refs

    q = q_ref[...]  # (S, D) f32
    k = k_ref[...]  # (S, D) f32
    v = v_ref[...]  # (S, D) f32

    # scores = Q @ K^T : contract the last dim of both operands, so no explicit
    # K transpose is materialized.
    scores = lax.dot_general(
        q, k, (((1,), (1,)), ((), ())),
        preferred_element_type=jnp.float32)             # (S, S)
    if inv_scale != 1.0:
        scores = scores * (1.0 / inv_scale)

    # Numerically stable softmax; exact divide (free accuracy at this size).
    m = jnp.max(scores, axis=-1, keepdims=True)
    e = jnp.exp(scores - m)
    denom = jnp.sum(e, axis=-1, keepdims=True)
    probs = e / denom

    # Dropout (training semantics): drop with prob p, scale survivors by 1/(1-p).
    if use_dropout:
        keep = bits_ref[...] >= jnp.uint32(keep_threshold)   # P(keep) = 1 - p
        probs = jnp.where(keep, probs * (1.0 / (1.0 - dropout_p)), 0.0)

    out = jnp.dot(probs, v, preferred_element_type=jnp.float32)  # (S, D)
    o_ref[...] = out.astype(o_ref.dtype)


def _to_bsd(x):
    """(seq, batch, dim) -> (batch, seq, dim).  Pure reshape when batch == 1."""
    S, B, D = x.shape
    if B == 1:
        return jnp.reshape(x, (1, S, D))
    return jnp.transpose(x, (1, 0, 2))


def _per_batch_spec(s, d):
    return pl.BlockSpec((None, s, d), lambda b: (b, 0, 0))


@functools.partial(jax.jit, static_argnames=("inv_scale",))
def _sdpa_nodrop_jit(Q, K, V, *, inv_scale):
    q, k, v = _to_bsd(Q), _to_bsd(K), _to_bsd(V)
    B, S, D = q.shape
    kernel = functools.partial(
        _attn_kernel, inv_scale=inv_scale, dropout_p=0.0, keep_threshold=0)
    return pl.pallas_call(
        kernel,
        out_shape=jax.ShapeDtypeStruct((B, S, D), q.dtype),
        grid=(B,),
        in_specs=[_per_batch_spec(S, D)] * 3,
        out_specs=_per_batch_spec(S, D),
        compiler_params=_CompilerParams(dimension_semantics=("parallel",)),
    )(q, k, v)


@functools.partial(jax.jit, static_argnames=("dropout_p", "inv_scale"))
def _sdpa_drop_jit(Q, K, V, key, *, dropout_p, inv_scale):
    q, k, v = _to_bsd(Q), _to_bsd(K), _to_bsd(V)
    B, S, D = q.shape
    # Raw uniform u32 bits; the keep test (bits >= threshold) runs in-kernel.
    bits = jax.random.bits(key, (B, S, S), dtype=jnp.uint32)
    # Integer dropout threshold: P(bits < threshold) == p (to within 2^-32).
    keep_threshold = min(int(round(dropout_p * 4294967296.0)), 4294967295)
    kernel = functools.partial(
        _attn_kernel, inv_scale=inv_scale, dropout_p=dropout_p,
        keep_threshold=keep_threshold)
    return pl.pallas_call(
        kernel,
        out_shape=jax.ShapeDtypeStruct((B, S, D), q.dtype),
        grid=(B,),
        in_specs=[_per_batch_spec(S, S)] + [_per_batch_spec(S, D)] * 3,
        out_specs=_per_batch_spec(S, D),
        compiler_params=_CompilerParams(dimension_semantics=("parallel",)),
    )(bits, q, k, v)


def sdpa_pallas(Q, K, V, dropout_p, inv_scale_factor, seed=0):
    """Q, K, V: (seq, batch, dim) float32 arrays (PyTorch layout of the module)."""
    dropout_p = float(dropout_p)
    inv_scale = float(inv_scale_factor)
    S, B, D = Q.shape

    if dropout_p >= 1.0:
        # p == 1 (module default) drops every probability -> output is exactly
        # zero (torch.F.dropout behavior).  Skip all HBM traffic and compute.
        return jnp.zeros((B, S, D), Q.dtype)

    if dropout_p <= 0.0:
        return _sdpa_nodrop_jit(Q, K, V, inv_scale=inv_scale)

    key = jax.random.PRNGKey(seed)
    return _sdpa_drop_jit(Q, K, V, key, dropout_p=dropout_p, inv_scale=inv_scale)


def sdpa_reference(Q, K, V, dropout_p, inv_scale_factor):
    """Pure-JAX reference (deterministic only for dropout_p in {0, 1})."""
    q = jnp.transpose(Q, (1, 0, 2))
    k = jnp.transpose(K, (1, 0, 2))
    v = jnp.transpose(V, (1, 0, 2))
    scores = jnp.einsum("bqd,bkd->bqk", q, k,
                        precision=lax.Precision.HIGHEST) / inv_scale_factor
    probs = jax.nn.softmax(scores, axis=-1)
    if dropout_p >= 1.0:
        probs = jnp.zeros_like(probs)
    # NOTE: for 0 < p < 1 the dropout mask differs from PyTorch by design, so
    # only statistical properties are checked for that case.
    return jnp.einsum("bqk,bkd->bqd", probs, v, precision=lax.Precision.HIGHEST)


if __name__ == "__main__":
    # Shapes of the original module: (seq=16, batch=1, dim=1024).
    S, B, D = 16, 1, 1024

    key = jax.random.PRNGKey(0)
    kq, kk, kv = jax.random.split(key, 3)
    Q = jax.random.normal(kq, (S, B, D), dtype=jnp.float32)
    K = jax.random.normal(kk, (S, B, D), dtype=jnp.float32)
    V = jax.random.normal(kv, (S, B, D), dtype=jnp.float32)

    # 1) Module's default config: dropout_p=1, inv_scale_factor=1 -> exact zeros.
    out_p1 = jax.block_until_ready(sdpa_pallas(Q, K, V, 1, 1))
    assert out_p1.shape == (B, S, D), out_p1.shape
    assert bool(jnp.all(out_p1 == 0.0)), "p=1 output must be exactly zero"

    # 2) p=0: full attention path through the Pallas kernel vs pure-JAX reference.
    out_p0 = jax.block_until_ready(sdpa_pallas(Q, K, V, 0.0, 1.0))
    ref_p0 = sdpa_reference(Q, K, V, 0.0, 1.0)
    assert out_p0.shape == (B, S, D), out_p0.shape
    assert bool(jnp.allclose(out_p0, ref_p0, rtol=2e-3, atol=2e-3)), \
        "mismatch vs reference (p=0)"

    # 3) 0 < p < 1: statistical check of the dropout path.  With V == 1 every
    #    output entry is the (rescaled) sum of kept softmax probabilities whose
    #    expectation is exactly 1.  An all-keep bug gives 2.0 (p=0.5), an
    #    all-drop bug 0.0 -- both far outside the bound.
    ones_V = jnp.ones((S, B, D), jnp.float32)
    scale = float(D) ** 0.5
    out_drop = jax.block_until_ready(sdpa_pallas(Q, K, ones_V, 0.5, scale, seed=123))
    assert out_drop.shape == (B, S, D), out_drop.shape
    assert bool(jnp.all(jnp.isfinite(out_drop)))
    mean_val = float(jnp.mean(out_drop))
    assert abs(mean_val - 1.0) < 0.5, f"dropout mean check failed: {mean_val}"

    print("KERNEL_OK")
</pallas_src>

<mosaic_0001>
module attributes {stable_mosaic.version = 11 : i64} {
  func.func @_attn_kernel(%arg0: i32, %arg1: memref<1x16x1024xf32, #tpu.memory_space<vmem>>, %arg2: memref<1x16x1024xf32, #tpu.memory_space<vmem>>, %arg3: memref<1x16x1024xf32, #tpu.memory_space<vmem>>, %arg4: memref<1x16x1024xf32, #tpu.memory_space<vmem>>) attributes {dimension_semantics = [#tpu.dimension_semantics<parallel>], iteration_bounds = array<i64: 1>, scalar_prefetch = 0 : i64, scratch_operands = 0 : i64, tpu.core_type = #tpu.core_type<tc>, window_params = [{transform_indices = @transform_0, window_bounds = array<i64: 1, 16, 1024>}, {transform_indices = @transform_1, window_bounds = array<i64: 1, 16, 1024>}, {transform_indices = @transform_2, window_bounds = array<i64: 1, 16, 1024>}, {transform_indices = @transform_3, window_bounds = array<i64: 1, 16, 1024>}]} {
    %c0 = arith.constant 0 : index
    %c0_0 = arith.constant 0 : index
    %c0_1 = arith.constant 0 : index
    %0 = vector.load %arg1[%c0, %c0_0, %c0_1] : memref<1x16x1024xf32, #tpu.memory_space<vmem>>, vector<1x16x1024xf32>
    %1 = vector.shape_cast %0 : vector<1x16x1024xf32> to vector<16x1024xf32>
    %c0_2 = arith.constant 0 : index
    %c0_3 = arith.constant 0 : index
    %c0_4 = arith.constant 0 : index
    %2 = vector.load %arg2[%c0_2, %c0_3, %c0_4] : memref<1x16x1024xf32, #tpu.memory_space<vmem>>, vector<1x16x1024xf32>
    %3 = vector.shape_cast %2 : vector<1x16x1024xf32> to vector<16x1024xf32>
    %c0_5 = arith.constant 0 : index
    %c0_6 = arith.constant 0 : index
    %c0_7 = arith.constant 0 : index
    %4 = vector.load %arg3[%c0_5, %c0_6, %c0_7] : memref<1x16x1024xf32, #tpu.memory_space<vmem>>, vector<1x16x1024xf32>
    %5 = vector.shape_cast %4 : vector<1x16x1024xf32> to vector<16x1024xf32>
    %cst = arith.constant dense<0.000000e+00> : vector<16x16xf32>
    %6 = tpu.matmul %1, %3, %cst {dimension_numbers = #tpu.dot_dimension_numbers<[1], [1], [0], [0], [0, 0, 1, 0], [], []>} : vector<16x1024xf32>, vector<16x1024xf32>, vector<16x16xf32> -> vector<16x16xf32>
    %cst_8 = arith.constant dense<0xFF800000> : vector<16xf32>
    %7 = vector.multi_reduction <maximumf>, %6, %cst_8 [1] : vector<16x16xf32> to vector<16xf32>
    %8 = vector.shape_cast %7 : vector<16xf32> to vector<16x1xf32>
    %9 = vector.broadcast %8 : vector<16x1xf32> to vector<16x16xf32>
    %10 = arith.subf %6, %9 : vector<16x16xf32>
    %11 = math.exp %10 : vector<16x16xf32>
    %cst_9 = arith.constant dense<0.000000e+00> : vector<16xf32>
    %12 = vector.multi_reduction <add>, %11, %cst_9 [1] : vector<16x16xf32> to vector<16xf32>
    %13 = vector.shape_cast %12 : vector<16xf32> to vector<16x1xf32>
    %14 = vector.broadcast %13 : vector<16x1xf32> to vector<16x16xf32>
    %15 = arith.divf %11, %14 : vector<16x16xf32>
    %cst_10 = arith.constant dense<0.000000e+00> : vector<16x1024xf32>
    %16 = tpu.matmul %15, %5, %cst_10 {dimension_numbers = #tpu.dot_dimension_numbers<[1], [0], [0], [1], [0, 0, 1, 1], [], []>} : vector<16x16xf32>, vector<16x1024xf32>, vector<16x1024xf32> -> vector<16x1024xf32>
    %c0_11 = arith.constant 0 : index
    %c0_12 = arith.constant 0 : index
    %c0_13 = arith.constant 0 : index
    %17 = vector.load %arg4[%c0_11, %c0_12, %c0_13] : memref<1x16x1024xf32, #tpu.memory_space<vmem>>, vector<1x16x1024xf32>
    %18 = vector.shape_cast %17 : vector<1x16x1024xf32> to vector<16x1024xf32>
    %19 = vector.shape_cast %16 : vector<16x1024xf32> to vector<1x16x1024xf32>
    tpu.vector_store %arg4[%c0_11, %c0_12, %c0_13], %19 {strides = array<i32>} : memref<1x16x1024xf32, #tpu.memory_space<vmem>>, vector<1x16x1024xf32>,
    return
  }
  func.func @transform_0(%arg0: i32) -> (i32, i32, i32) {
    %c0_i32 = arith.constant 0 : i32
    %c0_i32_0 = arith.constant 0 : i32
    %c0_i32_1 = arith.constant 0 : i32
    return %arg0, %c0_i32, %c0_i32_0 : i32, i32, i32
  }
  func.func @transform_1(%arg0: i32) -> (i32, i32, i32) {
    %c0_i32 = arith.constant 0 : i32
    %c0_i32_0 = arith.constant 0 : i32
    %c0_i32_1 = arith.constant 0 : i32
    return %arg0, %c0_i32, %c0_i32_0 : i32, i32, i32
  }
  func.func @transform_2(%arg0: i32) -> (i32, i32, i32) {
    %c0_i32 = arith.constant 0 : i32
    %c0_i32_0 = arith.constant 0 : i32
    %c0_i32_1 = arith.constant 0 : i32
    return %arg0, %c0_i32, %c0_i32_0 : i32, i32, i32
  }
  func.func @transform_3(%arg0: i32) -> (i32, i32, i32) {
    %c0_i32 = arith.constant 0 : i32
    %c0_i32_0 = arith.constant 0 : i32
    %c0_i32_1 = arith.constant 0 : i32
    return %arg0, %c0_i32, %c0_i32_0 : i32, i32, i32
  }
}

</mosaic_0001>

<llo_original>
// kernel: _sdpa_nodrop_jit.1
$region0: #{_sdpa_nodrop_jit.1}
  #allocation0 [shape = 'u32[]', space=smem, size = 0x4, offset = 0x4, fixed_abs, tag = 'smem constant byte address 0x4 - core index']
  #allocation1 [shape = 'u32[72,128]{1,0:T(1,128)}', space=vmem, size = 0x9000, scoped, tag = 'internal scratch']
  %s0 = inlined_call_operand.vmem [shape: f32[1,16,1024], index: 0, kind: input, shape index: {}]
  %s1 = inlined_call_operand.vmem [shape: f32[1,16,1024], index: 1, kind: input, shape index: {}]
  %s2 = inlined_call_operand.vmem [shape: f32[1,16,1024], index: 2, kind: input, shape index: {}]
  %s3 = inlined_call_operand.hbm [shape: f32[1,16,1024], index: 3, kind: output, shape index: {}]
  %s4 = sld [smem:[#allocation0]]
  $region22: #{_sdpa_nodrop_jit.1} parent=0
    _
  %s6 = ssub.s32 1, %s4
  %s7 = scalar_select 0, %s6, %s4
  $region1: #{_sdpa_nodrop_jit.1} parent=0
    #allocation2 [shape = 'u8[65536]{0}', space=vmem, size = 0x10000, scoped, tag = 'output window, operand 0, single buffered']
    #allocation3 [shape = 's32[1]{0}', space=sflag, size = 0x4, scoped, tag = 'scoped memory for _sdpa_nodrop_jit.1']
    %8 = vsyncpa [#allocation3], 0
    // Predicated region
    $region2: #{_sdpa_nodrop_jit.1} parent=1 // pred_check
      _
    $region3: #{_sdpa_nodrop_jit.1} parent=1 // pred_check_branch
      %10 = sbr.rel (0) target = $region5
    $region4: #{_sdpa_nodrop_jit.1} parent=1 // pred_region
      _
    $region5: #{_sdpa_nodrop_jit.1} parent=1 // pred_fallthru
      _
    // Predicated region
    $region6: #{_sdpa_nodrop_jit.1} parent=1 // pred_check
      _
    $region7: #{_sdpa_nodrop_jit.1} parent=1 // pred_check_branch
      %12 = sbr.rel (0) target = $region9
    $region8: #{_sdpa_nodrop_jit.1} parent=1 // pred_region
      _
    $region9: #{_sdpa_nodrop_jit.1} parent=1 // pred_fallthru
      _
    // Predicated region
    $region10: #{_sdpa_nodrop_jit.1} parent=1 // pred_check
      _
    $region11: #{_sdpa_nodrop_jit.1} parent=1 // pred_check_branch
      %14 = sbr.rel (0) target = $region13
    $region12: #{_sdpa_nodrop_jit.1} parent=1 // pred_region
      _
    $region13: #{_sdpa_nodrop_jit.1} parent=1 // pred_fallthru
      _
    %v15 = vld [vmem:[%s0] sm:$0xff]
    %v16 = vld [vmem:[%s0 + $0x8] sm:$0xff]
    %v17 = vld [vmem:[%s0 + $0x10] sm:$0xff]
    %v18 = vld [vmem:[%s0 + $0x18] sm:$0xff]
    %v19 = vld [vmem:[%s0 + $0x20] sm:$0xff]
    %v20 = vld [vmem:[%s0 + $0x28] sm:$0xff]
    %v21 = vld [vmem:[%s0 + $0x30] sm:$0xff]
    %v22 = vld [vmem:[%s0 + $0x38] sm:$0xff]
    %v23 = vld [vmem:[%s0 + $0x40] sm:$0xff]
    %v24 = vld [vmem:[%s0 + $0x48] sm:$0xff]
    %v25 = vld [vmem:[%s0 + $0x50] sm:$0xff]
    %v26 = vld [vmem:[%s0 + $0x58] sm:$0xff]
    %v27 = vld [vmem:[%s0 + $0x60] sm:$0xff]
    %v28 = vld [vmem:[%s0 + $0x68] sm:$0xff]
    %v29 = vld [vmem:[%s0 + $0x70] sm:$0xff]
    %v30 = vld [vmem:[%s0 + $0x78] sm:$0xff]
    %v31 = vld [vmem:[%s1] sm:$0xff]
    %v32 = vld [vmem:[%s1 + $0x8] sm:$0xff]
    %v33 = vld [vmem:[%s1 + $0x10] sm:$0xff]
    %v34 = vld [vmem:[%s1 + $0x18] sm:$0xff]
    %v35 = vld [vmem:[%s1 + $0x20] sm:$0xff]
    %v36 = vld [vmem:[%s1 + $0x28] sm:$0xff]
    %v37 = vld [vmem:[%s1 + $0x30] sm:$0xff]
    %v38 = vld [vmem:[%s1 + $0x38] sm:$0xff]
    %v39 = vld [vmem:[%s1 + $0x40] sm:$0xff]
    %v40 = vld [vmem:[%s1 + $0x48] sm:$0xff]
    %v41 = vld [vmem:[%s1 + $0x50] sm:$0xff]
    %v42 = vld [vmem:[%s1 + $0x58] sm:$0xff]
    %v43 = vld [vmem:[%s1 + $0x60] sm:$0xff]
    %v44 = vld [vmem:[%s1 + $0x68] sm:$0xff]
    %v45 = vld [vmem:[%s1 + $0x70] sm:$0xff]
    %v46 = vld [vmem:[%s1 + $0x78] sm:$0xff]
    %v47 = vld [vmem:[%s2] sm:$0xff]
    %v48 = vld [vmem:[%s2 + $0x8] sm:$0xff]
    %v49 = vld [vmem:[%s2 + $0x10] sm:$0xff]
    %v50 = vld [vmem:[%s2 + $0x18] sm:$0xff]
    %v51 = vld [vmem:[%s2 + $0x20] sm:$0xff]
    %v52 = vld [vmem:[%s2 + $0x28] sm:$0xff]
    %v53 = vld [vmem:[%s2 + $0x30] sm:$0xff]
    %v54 = vld [vmem:[%s2 + $0x38] sm:$0xff]
    %v55 = vld [vmem:[%s2 + $0x40] sm:$0xff]
    %v56 = vld [vmem:[%s2 + $0x48] sm:$0xff]
    %v57 = vld [vmem:[%s2 + $0x50] sm:$0xff]
    %v58 = vld [vmem:[%s2 + $0x58] sm:$0xff]
    %v59 = vld [vmem:[%s2 + $0x60] sm:$0xff]
    %v60 = vld [vmem:[%s2 + $0x68] sm:$0xff]
    %v61 = vld [vmem:[%s2 + $0x70] sm:$0xff]
    %v62 = vld [vmem:[%s2 + $0x78] sm:$0xff]
    %63 = vmatpush.xpose.msra.mxu0 0.0
    %64 = vmatpush.xpose.msra.mxu0 0.0
    %65 = vmatpush.xpose.msra.mxu0 0.0
    %66 = vmatpush.xpose.msra.mxu0 0.0
    %67 = vmatpush.xpose.msra.mxu0 0.0
    %68 = vmatpush.xpose.msra.mxu0 0.0
    %69 = vmatpush.xpose.msra.mxu0 0.0
    %70 = vmatpush.xpose.msra.mxu0 0.0
    %71 = vmatpush.xpose.msra.mxu0 0.0
    %72 = vmatpush.xpose.msra.mxu0 0.0
    %73 = vmatpush.xpose.msra.mxu0 0.0
    %74 = vmatpush.xpose.msra.mxu0 0.0
    %75 = vmatpush.xpose.msra.mxu0 0.0
    %76 = vmatpush.xpose.msra.mxu0 0.0
    %77 = vmatpush.xpose.msra.mxu0 %v39
    %78 = vmatpush.xpose.msra.mxu0 %v31
    %79 = vmatmul.f32.gmra.mxu0 %v15
    %v80 = vpop.f32.mrf.mxu0
    %v81 = vadd.f32 0.0, %v80
    %82 = vmatmul.f32.gmra.mxu0 %v23
    %v83 = vpop.f32.mrf.mxu0
    %v84 = vadd.f32 0.0, %v83
    %85 = vdwg.mxu0
    %86 = vmatpush.xpose.msra.mxu0 0.0
    %87 = vmatpush.xpose.msra.mxu0 0.0
    %88 = vmatpush.xpose.msra.mxu0 0.0
    %89 = vmatpush.xpose.msra.mxu0 0.0
    %90 = vmatpush.xpose.msra.mxu0 0.0
    %91 = vmatpush.xpose.msra.mxu0 0.0
    %92 = vmatpush.xpose.msra.mxu0 0.0
    %93 = vmatpush.xpose.msra.mxu0 0.0
    %94 = vmatpush.xpose.msra.mxu0 0.0
    %95 = vmatpush.xpose.msra.mxu0 0.0
    %96 = vmatpush.xpose.msra.mxu0 0.0
    %97 = vmatpush.xpose.msra.mxu0 0.0
    %98 = vmatpush.xpose.msra.mxu0 0.0
    %99 = vmatpush.xpose.msra.mxu0 0.0
    %100 = vmatpush.xpose.msra.mxu0 %v40
    %101 = vmatpush.xpose.msra.mxu0 %v32
    %102 = vmatmul.f32.gmra.mxu0 %v16
    %v103 = vpop.f32.mrf.mxu0
    %v104 = vadd.f32 %v81, %v103
    %105 = vmatmul.f32.gmra.mxu0 %v24
    %v106 = vpop.f32.mrf.mxu0
    %v107 = vadd.f32 %v84, %v106
    %108 = vdwg.mxu0
    %109 = vmatpush.xpose.msra.mxu0 0.0
    %110 = vmatpush.xpose.msra.mxu0 0.0
    %111 = vmatpush.xpose.msra.mxu0 0.0
    %112 = vmatpush.xpose.msra.mxu0 0.0
    %113 = vmatpush.xpose.msra.mxu0 0.0
    %114 = vmatpush.xpose.msra.mxu0 0.0
    %115 = vmatpush.xpose.msra.mxu0 0.0
    %116 = vmatpush.xpose.msra.mxu0 0.0
    %117 = vmatpush.xpose.msra.mxu0 0.0
    %118 = vmatpush.xpose.msra.mxu0 0.0
    %119 = vmatpush.xpose.msra.mxu0 0.0
    %120 = vmatpush.xpose.msra.mxu0 0.0
    %121 = vmatpush.xpose.msra.mxu0 0.0
    %122 = vmatpush.xpose.msra.mxu0 0.0
    %123 = vmatpush.xpose.msra.mxu0 %v41
    %124 = vmatpush.xpose.msra.mxu0 %v33
    %125 = vmatmul.f32.gmra.mxu0 %v17
    %v126 = vpop.f32.mrf.mxu0
    %v127 = vadd.f32 %v104, %v126
    %128 = vmatmul.f32.gmra.mxu0 %v25
    %v129 = vpop.f32.mrf.mxu0
    %v130 = vadd.f32 %v107, %v129
    %131 = vdwg.mxu0
    %132 = vmatpush.xpose.msra.mxu0 0.0
    %133 = vmatpush.xpose.msra.mxu0 0.0
    %134 = vmatpush.xpose.msra.mxu0 0.0
    %135 = vmatpush.xpose.msra.mxu0 0.0
    %136 = vmatpush.xpose.msra.mxu0 0.0
    %137 = vmatpush.xpose.msra.mxu0 0.0
    %138 = vmatpush.xpose.msra.mxu0 0.0
    %139 = vmatpush.xpose.msra.mxu0 0.0
    %140 = vmatpush.xpose.msra.mxu0 0.0
    %141 = vmatpush.xpose.msra.mxu0 0.0
    %142 = vmatpush.xpose.msra.mxu0 0.0
    %143 = vmatpush.xpose.msra.mxu0 0.0
    %144 = vmatpush.xpose.msra.mxu0 0.0
    %145 = vmatpush.xpose.msra.mxu0 0.0
    %146 = vmatpush.xpose.msra.mxu0 %v42
    %147 = vmatpush.xpose.msra.mxu0 %v34
    %148 = vmatmul.f32.gmra.mxu0 %v18
    %v149 = vpop.f32.mrf.mxu0
    %v150 = vadd.f32 %v127, %v149
    %151 = vmatmul.f32.gmra.mxu0 %v26
    %v152 = vpop.f32.mrf.mxu0
    %v153 = vadd.f32 %v130, %v152
    %154 = vdwg.mxu0
    %155 = vmatpush.xpose.msra.mxu0 0.0
    %156 = vmatpush.xpose.msra.mxu0 0.0
    %157 = vmatpush.xpose.msra.mxu0 0.0
    %158 = vmatpush.xpose.msra.mxu0 0.0
    %159 = vmatpush.xpose.msra.mxu0 0.0
    %160 = vmatpush.xpose.msra.mxu0 0.0
    %161 = vmatpush.xpose.msra.mxu0 0.0
    %162 = vmatpush.xpose.msra.mxu0 0.0
    %163 = vmatpush.xpose.msra.mxu0 0.0
    %164 = vmatpush.xpose.msra.mxu0 0.0
    %165 = vmatpush.xpose.msra.mxu0 0.0
    %166 = vmatpush.xpose.msra.mxu0 0.0
    %167 = vmatpush.xpose.msra.mxu0 0.0
    %168 = vmatpush.xpose.msra.mxu0 0.0
    %169 = vmatpush.xpose.msra.mxu0 %v43
    %170 = vmatpush.xpose.msra.mxu0 %v35
    %171 = vmatmul.f32.gmra.mxu0 %v19
    %v172 = vpop.f32.mrf.mxu0
    %v173 = vadd.f32 %v150, %v172
    %174 = vmatmul.f32.gmra.mxu0 %v27
    %v175 = vpop.f32.mrf.mxu0
    %v176 = vadd.f32 %v153, %v175
    %177 = vdwg.mxu0
    %178 = vmatpush.xpose.msra.mxu0 0.0
    %179 = vmatpush.xpose.msra.mxu0 0.0
    %180 = vmatpush.xpose.msra.mxu0 0.0
    %181 = vmatpush.xpose.msra.mxu0 0.0
    %182 = vmatpush.xpose.msra.mxu0 0.0
    %183 = vmatpush.xpose.msra.mxu0 0.0
    %184 = vmatpush.xpose.msra.mxu0 0.0
    %185 = vmatpush.xpose.msra.mxu0 0.0
    %186 = vmatpush.xpose.msra.mxu0 0.0
    %187 = vmatpush.xpose.msra.mxu0 0.0
    %188 = vmatpush.xpose.msra.mxu0 0.0
    %189 = vmatpush.xpose.msra.mxu0 0.0
    %190 = vmatpush.xpose.msra.mxu0 0.0
    %191 = vmatpush.xpose.msra.mxu0 0.0
    %192 = vmatpush.xpose.msra.mxu0 %v44
    %193 = vmatpush.xpose.msra.mxu0 %v36
    %194 = vmatmul.f32.gmra.mxu0 %v20
    %v195 = vpop.f32.mrf.mxu0
    %v196 = vadd.f32 %v173, %v195
    %197 = vmatmul.f32.gmra.mxu0 %v28
    %v198 = vpop.f32.mrf.mxu0
    %v199 = vadd.f32 %v176, %v198
    %200 = vdwg.mxu0
    %201 = vmatpush.xpose.msra.mxu0 0.0
    %202 = vmatpush.xpose.msra.mxu0 0.0
    %203 = vmatpush.xpose.msra.mxu0 0.0
    %204 = vmatpush.xpose.msra.mxu0 0.0
    %205 = vmatpush.xpose.msra.mxu0 0.0
    %206 = vmatpush.xpose.msra.mxu0 0.0
    %207 = vmatpush.xpose.msra.mxu0 0.0
    %208 = vmatpush.xpose.msra.mxu0 0.0
    %209 = vmatpush.xpose.msra.mxu0 0.0
    %210 = vmatpush.xpose.msra.mxu0 0.0
    %211 = vmatpush.xpose.msra.mxu0 0.0
    %212 = vmatpush.xpose.msra.mxu0 0.0
    %213 = vmatpush.xpose.msra.mxu0 0.0
    %214 = vmatpush.xpose.msra.mxu0 0.0
    %215 = vmatpush.xpose.msra.mxu0 %v45
    %216 = vmatpush.xpose.msra.mxu0 %v37
    %217 = vmatmul.f32.gmra.mxu0 %v21
    %v218 = vpop.f32.mrf.mxu0
    %v219 = vadd.f32 %v196, %v218
    %220 = vmatmul.f32.gmra.mxu0 %v29
    %v221 = vpop.f32.mrf.mxu0
    %v222 = vadd.f32 %v199, %v221
    %223 = vdwg.mxu0
    %224 = vmatpush.xpose.msra.mxu0 0.0
    %225 = vmatpush.xpose.msra.mxu0 0.0
    %226 = vmatpush.xpose.msra.mxu0 0.0
    %227 = vmatpush.xpose.msra.mxu0 0.0
    %228 = vmatpush.xpose.msra.mxu0 0.0
    %229 = vmatpush.xpose.msra.mxu0 0.0
    %230 = vmatpush.xpose.msra.mxu0 0.0
    %231 = vmatpush.xpose.msra.mxu0 0.0
    %232 = vmatpush.xpose.msra.mxu0 0.0
    %233 = vmatpush.xpose.msra.mxu0 0.0
    %234 = vmatpush.xpose.msra.mxu0 0.0
    %235 = vmatpush.xpose.msra.mxu0 0.0
    %236 = vmatpush.xpose.msra.mxu0 0.0
    %237 = vmatpush.xpose.msra.mxu0 0.0
    %238 = vmatpush.xpose.msra.mxu0 %v46
    %239 = vmatpush.xpose.msra.mxu0 %v38
    %240 = vmatmul.f32.gmra.mxu0 %v22
    %v241 = vpop.f32.mrf.mxu0
    %v242 = vadd.f32 %v219, %v241
    %243 = vmatmul.f32.gmra.mxu0 %v30
    %v244 = vpop.f32.mrf.mxu0
    %v245 = vadd.f32 %v222, %v244
    %246 = vdwg.mxu0
    %vm247 = vcmask 130048
    %v248 = vsel %vm247, %v242, -inf
    %249 = vmax.xlane.f32.xlu0 %v248
    %v250 = vpop.xlane.xlu0 %249
    %v251 = vsel %vm247, %v245, -inf
    %252 = vmax.xlane.f32.xlu0 %v251
    %v253 = vpop.xlane.xlu0 %252
    %v254 = vsub.f32 %v242, %v250
    %v255 = vsub.f32 %v245, %v253
    %v256 = vmul.f32 %v254, 1.442695
    %v257 = vpow.pop %v256
    %v258 = vmul.f32 %v255, 1.442695
    %v259 = vpow.pop %v258
    %v260 = vsel %vm247, %v257, 0.0
    %261 = vadd.xlane.f32.xlu0 %v260
    %v262 = vpop.xlane.xlu0 %261
    %v263 = vsel %vm247, %v259, 0.0
    %264 = vadd.xlane.f32.xlu0 %v263
    %v265 = vpop.xlane.xlu0 %264
    %v266 = vrcp.pop %v262
    %v267 = vmul.f32 %v262, %v266
    %v268 = vsub.f32 1.0, %v267
    %v269 = vmul.f32 %v266, %v268
    %v270 = vadd.f32 %v266, %v269
    %vm271 = vweird.f32 %v262
    %vm272 = vweird.f32 %v266
    %vm273 = vmor %vm271, %vm272
    %v274 = vsel %vm273, %v266, %v270
    %v275 = vand.u32 2147483647, %v262
    %vm276 = vcmp.eq.f32.partialorder %v275, 8.507059e+37
    %v277 = vand.u32 %v262, 2147483648
    %v278 = vor.u32 1.1754944e-38, %v277
    %v279 = vsel %vm276, %v278, %v274
    %v280 = vmul.f32 %v257, %v279
    %v281 = vrcp.pop %v265
    %v282 = vmul.f32 %v265, %v281
    %v283 = vsub.f32 1.0, %v282
    %v284 = vmul.f32 %v281, %v283
    %v285 = vadd.f32 %v281, %v284
    %vm286 = vweird.f32 %v265
    %vm287 = vweird.f32 %v281
    %vm288 = vmor %vm286, %vm287
    %v289 = vsel %vm288, %v281, %v285
    %v290 = vand.u32 2147483647, %v265
    %vm291 = vcmp.eq.f32.partialorder %v290, 8.507059e+37
    %v292 = vand.u32 %v265, 2147483648
    %v293 = vor.u32 1.1754944e-38, %v292
    %v294 = vsel %vm291, %v293, %v289
    %v295 = vmul.f32 %v259, %v294
    %v297 = vsel %vm247, %v280, 0
    %v300 = vsel %vm247, %v295, 0
    %302 = vmatpush.msra.mxu0 0.0
    %303 = vmatpush.msra.mxu0 0.0
    %304 = vmatpush.msra.mxu0 0.0
    %305 = vmatpush.msra.mxu0 0.0
    %306 = vmatpush.msra.mxu0 0.0
    %307 = vmatpush.msra.mxu0 0.0
    %308 = vmatpush.msra.mxu0 0.0
    %309 = vmatpush.msra.mxu0 0.0
    %310 = vmatpush.msra.mxu0 0.0
    %311 = vmatpush.msra.mxu0 0.0
    %312 = vmatpush.msra.mxu0 0.0
    %313 = vmatpush.msra.mxu0 0.0
    %314 = vmatpush.msra.mxu0 0.0
    %315 = vmatpush.msra.mxu0 0.0
    %316 = vmatpush.msra.mxu0 %v55
    %317 = vmatpush.msra.mxu0 %v47
    %318 = vmatmul.f32.gmra.mxu0 %v297
    %v319 = vpop.f32.mrf.mxu0
    %v320 = vadd.f32 0.0, %v319
    %321 = vmatmul.f32.gmra.mxu0 %v300
    %v322 = vpop.f32.mrf.mxu0
    %v323 = vadd.f32 0.0, %v322
    %324 = vdwg.mxu0
    %325 = vmatpush.msra.mxu0 0.0
    %326 = vmatpush.msra.mxu0 0.0
    %327 = vmatpush.msra.mxu0 0.0
    %328 = vmatpush.msra.mxu0 0.0
    %329 = vmatpush.msra.mxu0 0.0
    %330 = vmatpush.msra.mxu0 0.0
    %331 = vmatpush.msra.mxu0 0.0
    %332 = vmatpush.msra.mxu0 0.0
    %333 = vmatpush.msra.mxu0 0.0
    %334 = vmatpush.msra.mxu0 0.0
    %335 = vmatpush.msra.mxu0 0.0
    %336 = vmatpush.msra.mxu0 0.0
    %337 = vmatpush.msra.mxu0 0.0
    %338 = vmatpush.msra.mxu0 0.0
    %339 = vmatpush.msra.mxu0 %v56
    %340 = vmatpush.msra.mxu0 %v48
    %341 = vmatmul.f32.gmra.mxu0 %v297
    %v342 = vpop.f32.mrf.mxu0
    %v343 = vadd.f32 0.0, %v342
    %344 = vmatmul.f32.gmra.mxu0 %v300
    %v345 = vpop.f32.mrf.mxu0
    %v346 = vadd.f32 0.0, %v345
    %347 = vdwg.mxu0
    %348 = vmatpush.msra.mxu0 0.0
    %349 = vmatpush.msra.mxu0 0.0
    %350 = vmatpush.msra.mxu0 0.0
    %351 = vmatpush.msra.mxu0 0.0
    %352 = vmatpush.msra.mxu0 0.0
    %353 = vmatpush.msra.mxu0 0.0
    %354 = vmatpush.msra.mxu0 0.0
    %355 = vmatpush.msra.mxu0 0.0
    %356 = vmatpush.msra.mxu0 0.0
    %357 = vmatpush.msra.mxu0 0.0
    %358 = vmatpush.msra.mxu0 0.0
    %359 = vmatpush.msra.mxu0 0.0
    %360 = vmatpush.msra.mxu0 0.0
    %361 = vmatpush.msra.mxu0 0.0
    %362 = vmatpush.msra.mxu0 %v57
    %363 = vmatpush.msra.mxu0 %v49
    %364 = vmatmul.f32.gmra.mxu0 %v297
    %v365 = vpop.f32.mrf.mxu0
    %v366 = vadd.f32 0.0, %v365
    %367 = vmatmul.f32.gmra.mxu0 %v300
    %v368 = vpop.f32.mrf.mxu0
    %v369 = vadd.f32 0.0, %v368
    %370 = vdwg.mxu0
    %371 = vmatpush.msra.mxu0 0.0
    %372 = vmatpush.msra.mxu0 0.0
    %373 = vmatpush.msra.mxu0 0.0
    %374 = vmatpush.msra.mxu0 0.0
    %375 = vmatpush.msra.mxu0 0.0
    %376 = vmatpush.msra.mxu0 0.0
    %377 = vmatpush.msra.mxu0 0.0
    %378 = vmatpush.msra.mxu0 0.0
    %379 = vmatpush.msra.mxu0 0.0
    %380 = vmatpush.msra.mxu0 0.0
    %381 = vmatpush.msra.mxu0 0.0
    %382 = vmatpush.msra.mxu0 0.0
    %383 = vmatpush.msra.mxu0 0.0
    %384 = vmatpush.msra.mxu0 0.0
    %385 = vmatpush.msra.mxu0 %v58
    %386 = vmatpush.msra.mxu0 %v50
    %387 = vmatmul.f32.gmra.mxu0 %v297
    %v388 = vpop.f32.mrf.mxu0
    %v389 = vadd.f32 0.0, %v388
    %390 = vmatmul.f32.gmra.mxu0 %v300
    %v391 = vpop.f32.mrf.mxu0
    %v392 = vadd.f32 0.0, %v391
    %393 = vdwg.mxu0
    %394 = vmatpush.msra.mxu0 0.0
    %395 = vmatpush.msra.mxu0 0.0
    %396 = vmatpush.msra.mxu0 0.0
    %397 = vmatpush.msra.mxu0 0.0
    %398 = vmatpush.msra.mxu0 0.0
    %399 = vmatpush.msra.mxu0 0.0
    %400 = vmatpush.msra.mxu0 0.0
    %401 = vmatpush.msra.mxu0 0.0
    %402 = vmatpush.msra.mxu0 0.0
    %403 = vmatpush.msra.mxu0 0.0
    %404 = vmatpush.msra.mxu0 0.0
    %405 = vmatpush.msra.mxu0 0.0
    %406 = vmatpush.msra.mxu0 0.0
    %407 = vmatpush.msra.mxu0 0.0
    %408 = vmatpush.msra.mxu0 %v59
    %409 = vmatpush.msra.mxu0 %v51
    %410 = vmatmul.f32.gmra.mxu0 %v297
    %v411 = vpop.f32.mrf.mxu0
    %v412 = vadd.f32 0.0, %v411
    %413 = vmatmul.f32.gmra.mxu0 %v300
    %v414 = vpop.f32.mrf.mxu0
    %v415 = vadd.f32 0.0, %v414
    %416 = vdwg.mxu0
    %417 = vmatpush.msra.mxu0 0.0
    %418 = vmatpush.msra.mxu0 0.0
    %419 = vmatpush.msra.mxu0 0.0
    %420 = vmatpush.msra.mxu0 0.0
    %421 = vmatpush.msra.mxu0 0.0
    %422 = vmatpush.msra.mxu0 0.0
    %423 = vmatpush.msra.mxu0 0.0
    %424 = vmatpush.msra.mxu0 0.0
    %425 = vmatpush.msra.mxu0 0.0
    %426 = vmatpush.msra.mxu0 0.0
    %427 = vmatpush.msra.mxu0 0.0
    %428 = vmatpush.msra.mxu0 0.0
    %429 = vmatpush.msra.mxu0 0.0
    %430 = vmatpush.msra.mxu0 0.0
    %431 = vmatpush.msra.mxu0 %v60
    %432 = vmatpush.msra.mxu0 %v52
    %433 = vmatmul.f32.gmra.mxu0 %v297
    %v434 = vpop.f32.mrf.mxu0
    %v435 = vadd.f32 0.0, %v434
    %436 = vmatmul.f32.gmra.mxu0 %v300
    %v437 = vpop.f32.mrf.mxu0
    %v438 = vadd.f32 0.0, %v437
    %439 = vdwg.mxu0
    %440 = vmatpush.msra.mxu0 0.0
    %441 = vmatpush.msra.mxu0 0.0
    %442 = vmatpush.msra.mxu0 0.0
    %443 = vmatpush.msra.mxu0 0.0
    %444 = vmatpush.msra.mxu0 0.0
    %445 = vmatpush.msra.mxu0 0.0
    %446 = vmatpush.msra.mxu0 0.0
    %447 = vmatpush.msra.mxu0 0.0
    %448 = vmatpush.msra.mxu0 0.0
    %449 = vmatpush.msra.mxu0 0.0
    %450 = vmatpush.msra.mxu0 0.0
    %451 = vmatpush.msra.mxu0 0.0
    %452 = vmatpush.msra.mxu0 0.0
    %453 = vmatpush.msra.mxu0 0.0
    %454 = vmatpush.msra.mxu0 %v61
    %455 = vmatpush.msra.mxu0 %v53
    %456 = vmatmul.f32.gmra.mxu0 %v297
    %v457 = vpop.f32.mrf.mxu0
    %v458 = vadd.f32 0.0, %v457
    %459 = vmatmul.f32.gmra.mxu0 %v300
    %v460 = vpop.f32.mrf.mxu0
    %v461 = vadd.f32 0.0, %v460
    %462 = vdwg.mxu0
    %463 = vmatpush.msra.mxu0 0.0
    %464 = vmatpush.msra.mxu0 0.0
    %465 = vmatpush.msra.mxu0 0.0
    %466 = vmatpush.msra.mxu0 0.0
    %467 = vmatpush.msra.mxu0 0.0
    %468 = vmatpush.msra.mxu0 0.0
    %469 = vmatpush.msra.mxu0 0.0
    %470 = vmatpush.msra.mxu0 0.0
    %471 = vmatpush.msra.mxu0 0.0
    %472 = vmatpush.msra.mxu0 0.0
    %473 = vmatpush.msra.mxu0 0.0
    %474 = vmatpush.msra.mxu0 0.0
    %475 = vmatpush.msra.mxu0 0.0
    %476 = vmatpush.msra.mxu0 0.0
    %477 = vmatpush.msra.mxu0 %v62
    %478 = vmatpush.msra.mxu0 %v54
    %479 = vmatmul.f32.gmra.mxu0 %v297
    %v480 = vpop.f32.mrf.mxu0
    %v481 = vadd.f32 0.0, %v480
    %482 = vmatmul.f32.gmra.mxu0 %v300
    %v483 = vpop.f32.mrf.mxu0
    %v484 = vadd.f32 0.0, %v483
    %485 = vdwg.mxu0
    %486 = vst [vmem:[#allocation2] sm:$0xff] %v320
    %487 = vst [vmem:[#allocation2 + $0x8] sm:$0xff] %v343
    %488 = vst [vmem:[#allocation2 + $0x10] sm:$0xff] %v366
    %489 = vst [vmem:[#allocation2 + $0x18] sm:$0xff] %v389
    %490 = vst [vmem:[#allocation2 + $0x20] sm:$0xff] %v412
    %491 = vst [vmem:[#allocation2 + $0x28] sm:$0xff] %v435
    %492 = vst [vmem:[#allocation2 + $0x30] sm:$0xff] %v458
    %493 = vst [vmem:[#allocation2 + $0x38] sm:$0xff] %v481
    %494 = vst [vmem:[#allocation2 + $0x40] sm:$0xff] %v323
    %495 = vst [vmem:[#allocation2 + $0x48] sm:$0xff] %v346
    %496 = vst [vmem:[#allocation2 + $0x50] sm:$0xff] %v369
    %497 = vst [vmem:[#allocation2 + $0x58] sm:$0xff] %v392
    %498 = vst [vmem:[#allocation2 + $0x60] sm:$0xff] %v415
    %499 = vst [vmem:[#allocation2 + $0x68] sm:$0xff] %v438
    %500 = vst [vmem:[#allocation2 + $0x70] sm:$0xff] %v461
    %501 = vst [vmem:[#allocation2 + $0x78] sm:$0xff] %v484
    // Predicated region
    $region14: #{_sdpa_nodrop_jit.1} parent=1 // pred_check
      _
    $region15: #{_sdpa_nodrop_jit.1} parent=1 // pred_check_branch
      %503 = sbr.rel (0) target = $region17
    $region16: #{_sdpa_nodrop_jit.1} parent=1 // pred_region
      %505 = vsyncadd [#allocation3], 0
      %s506 = sshll.u32 [#allocation2], 4
      %s507 = int_to_ptr.vmem [resolvable:$true] %s506
      %s508 = sshll.u32 %s3, 4
      %s509 = int_to_ptr.hbm [resolvable:$true] %s508
      %514 = dma.vmem_to_hbm [thread:$0]  %s507, 2048, %s509, [#allocation3], 1024, 1024, 64
    $region17: #{_sdpa_nodrop_jit.1} parent=1 // pred_fallthru
      _
    // Predicated region
    $region18: #{_sdpa_nodrop_jit.1} parent=1 // pred_check
      _
    $region19: #{_sdpa_nodrop_jit.1} parent=1 // pred_check_branch
      %516 = sbr.rel (0) target = $region21
    $region20: #{_sdpa_nodrop_jit.1} parent=1 // pred_region
      %518 = dma.done [#allocation3], 2048
    $region21: #{_sdpa_nodrop_jit.1} parent=1 // pred_fallthru
      _
    %519 = vsyncpa [#allocation3], 1

</llo_original>
